<compile_context>
chip_gen: v6e
topology: v6e:2x2x1
jax: 0.10.0
libtpu: 0.0.40
codegen_flags: <defaults>
</compile_context>

<pallas_src>
import math

import jax
import jax.numpy as jnp
from jax.experimental import pallas as pl
from jax.experimental.pallas import tpu as pltpu


def _round_up(x, m):
    return ((x + m - 1) // m) * m


def _vmem_capacity_bytes():
    try:
        return int(pltpu.get_tpu_info().vmem_capacity_bytes)
    except Exception:
        return 64 * 1024 * 1024  # conservative fallback (v7x per-TC VMEM)


# ---------------------------------------------------------------------------
# Kernels
# ---------------------------------------------------------------------------

def _make_resident_kernel(nk: int, th: int):
    """Weights fully VMEM-resident; grid iterates row tiles only."""

    def kernel(x_ref, w1_ref, b1_ref, w2_ref, b2_ref, o_ref):
        x = x_ref[...]
        b2 = b2_ref[...].astype(jnp.float32)
        if nk == 1:
            h = jnp.dot(x, w1_ref[...], preferred_element_type=jnp.float32)
            h = jnp.maximum(h + b1_ref[...].astype(jnp.float32), 0.0)
            o = jnp.dot(h.astype(w2_ref.dtype), w2_ref[...],
                        preferred_element_type=jnp.float32) + b2
            o_ref[...] = o.astype(o_ref.dtype)
        else:
            # Chunk the hidden dim so the f32 intermediate stays small; the
            # weights themselves stay resident (static slices of the refs).
            acc = jnp.zeros((x_ref.shape[0], o_ref.shape[1]), jnp.float32)
            for k in range(nk):  # static unroll over hidden chunks
                lo = k * th
                h = jnp.dot(x, w1_ref[:, lo:lo + th],
                            preferred_element_type=jnp.float32)
                h = jnp.maximum(h + b1_ref[:, lo:lo + th].astype(jnp.float32), 0.0)
                acc = acc + jnp.dot(h.astype(w2_ref.dtype), w2_ref[lo:lo + th, :],
                                    preferred_element_type=jnp.float32)
            o_ref[...] = (acc + b2).astype(o_ref.dtype)

    return kernel


def _stream_kernel(x_ref, w1_ref, b1_ref, w2_ref, b2_ref, o_ref, acc_ref):
    """Hidden-dim slabs streamed from HBM; f32 accumulator scratch."""
    k = pl.program_id(1)

    @pl.when(k == 0)
    def _():
        acc_ref[...] = jnp.zeros_like(acc_ref)

    h = jnp.dot(x_ref[...], w1_ref[...], preferred_element_type=jnp.float32)
    h = jnp.maximum(h + b1_ref[...].astype(jnp.float32), 0.0)
    acc_ref[...] += jnp.dot(h.astype(w2_ref.dtype), w2_ref[...],
                            preferred_element_type=jnp.float32)

    @pl.when(k == pl.num_programs(1) - 1)
    def _():
        o_ref[...] = (acc_ref[...] + b2_ref[...].astype(jnp.float32)).astype(o_ref.dtype)


# ---------------------------------------------------------------------------
# Wrapper
# ---------------------------------------------------------------------------

def feed_forward(x, w1, b1, w2, b2, *, tm=None):
    """x: [..., D] -> [..., D];  w1: [D, H], b1: [1, H] (or [H]), w2: [H, D], b2: [1, D] (or [D])."""
    D = x.shape[-1]
    H = w1.shape[-1]
    lead = x.shape[:-1]
    M = int(math.prod(lead))

    b1 = b1.reshape(1, H)
    b2 = b2.reshape(1, D)

    x_itemsize = jnp.dtype(x.dtype).itemsize
    w_itemsize = jnp.dtype(w1.dtype).itemsize

    vmem_cap = _vmem_capacity_bytes()
    budget = int(0.80 * vmem_cap)          # headroom for compiler-internal scratch

    # Lane-dense / MXU-friendly padded dims.
    Dp = _round_up(D, 128)
    Hp = _round_up(H, 128)

    # Row tile: big enough to keep arithmetic intensity above the HBM roofline
    # on the streaming path and to amortize per-step overhead on the resident
    # path.  Sublane floor of 16 for sub-32-bit activations (bf16 min tile).
    sub = 16 if x_itemsize < 4 else 8
    if tm is None:
        tm = 1024 if vmem_cap >= 96 * 1024 * 1024 else 512
    tm = max(sub, min(_round_up(tm, sub), _round_up(M, sub)))

    # --- VMEM byte models (include f32 `h` intermediate and dot temporaries) -
    w_full_bytes = 2 * (Dp * Hp + Hp * Dp + Hp + Dp) * w_itemsize  # 2x: pipeline buffers

    def resident_bytes(tm_, th_):
        return (4 * tm_ * Dp * x_itemsize          # x + out tiles (double-buffered)
                + w_full_bytes                     # W1/W2/b1/b2 resident
                + 2 * tm_ * Dp * 4                 # f32 acc + pre-add dot temp
                + tm_ * th_ * 4)                   # f32 h chunk

    def stream_bytes(tm_, th_):
        return (4 * tm_ * Dp * x_itemsize                             # x + out tiles
                + 2 * (Dp * th_ + th_ * Dp + th_ + Dp) * w_itemsize   # weight slabs (2 bufs)
                + tm_ * Dp * 4                                        # f32 acc scratch
                + tm_ * Dp * 4 + tm_ * th_ * 4)                       # dot temp + f32 h

    def largest_fitting_th(fn, tm_):
        th_ = Hp
        while th_ >= 128:
            if Hp % th_ == 0 and fn(tm_, th_) <= budget:
                return th_
            th_ -= 128
        return None

    resident_th = largest_fitting_th(resident_bytes, tm)
    stream_th = None
    if resident_th is None:
        stream_th = largest_fitting_th(stream_bytes, tm)
        while stream_th is None and tm > sub:
            tm = max(sub, _round_up(tm // 2, sub))
            stream_th = largest_fitting_th(stream_bytes, tm)
        if stream_th is None:
            stream_th = 128  # last resort

    Mp = _round_up(M, tm)

    # Zero-pad only when needed (padded hidden cols hit zero W2 rows, padded
    # rows / D cols are sliced off -> numerically benign).
    xf = x.reshape(M, D)
    if (Mp, Dp) != (M, D):
        xf = jnp.pad(xf, ((0, Mp - M), (0, Dp - D)))
    if (Dp, Hp) != (D, H):
        w1 = jnp.pad(w1, ((0, Dp - D), (0, Hp - H)))
        w2 = jnp.pad(w2, ((0, Hp - H), (0, Dp - D)))
    if Hp != H:
        b1 = jnp.pad(b1, ((0, 0), (0, Hp - H)))
    if Dp != D:
        b2 = jnp.pad(b2, ((0, 0), (0, Dp - D)))

    if resident_th is not None:
        # --------------------- RESIDENT-WEIGHT PATH -------------------------
        nk = Hp // resident_th
        kernel = _make_resident_kernel(nk, resident_th)
        est_bytes = resident_bytes(tm, resident_th)
        hbm_bytes = (Mp * Dp * x_itemsize * 2                       # x in + out
                     + (Dp * Hp + Hp * Dp + Hp + Dp) * w_itemsize)  # weights once
        grid_spec = pltpu.PrefetchScalarGridSpec(
            num_scalar_prefetch=0,
            grid=(Mp // tm,),
            in_specs=[
                pl.BlockSpec((tm, Dp), lambda i: (i, 0)),   # row tile
                # Full-extent blocks with constant index_maps: fetched once,
                # kept VMEM-resident for the whole row grid.
                pl.BlockSpec((Dp, Hp), lambda i: (0, 0)),   # W1
                pl.BlockSpec((1, Hp), lambda i: (0, 0)),    # b1
                pl.BlockSpec((Hp, Dp), lambda i: (0, 0)),   # W2
                pl.BlockSpec((1, Dp), lambda i: (0, 0)),    # b2
            ],
            out_specs=pl.BlockSpec((tm, Dp), lambda i: (i, 0)),
        )
        dim_sem = ("parallel",)
    else:
        # ----------------------- STREAMING PATH -----------------------------
        th = stream_th
        kernel = _stream_kernel
        est_bytes = stream_bytes(tm, th)
        hbm_bytes = (Mp * Dp * x_itemsize * 2
                     + (Mp // tm) * (Dp * Hp + Hp * Dp + Hp) * w_itemsize
                     + Dp * w_itemsize)
        grid_spec = pltpu.PrefetchScalarGridSpec(
            num_scalar_prefetch=0,
            grid=(Mp // tm, Hp // th),
            in_specs=[
                pl.BlockSpec((tm, Dp), lambda i, k: (i, 0)),   # x rows (resident over k)
                pl.BlockSpec((Dp, th), lambda i, k: (0, k)),   # W1 hidden slab
                pl.BlockSpec((1, th), lambda i, k: (0, k)),    # b1 slab
                pl.BlockSpec((th, Dp), lambda i, k: (k, 0)),   # W2 hidden slab
                pl.BlockSpec((1, Dp), lambda i, k: (0, 0)),    # b2 (constant block)
            ],
            out_specs=pl.BlockSpec((tm, Dp), lambda i, k: (i, 0)),
            scratch_shapes=[pltpu.VMEM((tm, Dp), jnp.float32)],
        )
        dim_sem = ("parallel", "arbitrary")
        # TODO(synk): optionally pipeline_mode=pl.Buffered(3) on the W1/W2 slab
        # specs on v7x if xprof shows exposed DMA at row-tile boundaries.

    vmem_limit = int(est_bytes * 1.4) + (2 << 20)
    vmem_limit = max(vmem_limit, 32 * 1024 * 1024)
    vmem_limit = min(vmem_limit, int(0.9 * vmem_cap))

    cost = pl.CostEstimate(
        flops=4 * Mp * Dp * Hp,            # two matmuls: 2*M*D*H flops each
        transcendentals=0,
        bytes_accessed=int(hbm_bytes),
    )

    out = pl.pallas_call(
        kernel,
        out_shape=jax.ShapeDtypeStruct((Mp, Dp), x.dtype),
        grid_spec=grid_spec,
        compiler_params=pltpu.CompilerParams(
            dimension_semantics=dim_sem,
            vmem_limit_bytes=vmem_limit,
        ),
        cost_estimate=cost,
    )(xf, w1, b1, w2, b2)

    return out[:M, :D].reshape(*lead, D)


def init_params(key, embed_dim, dtype=jnp.float32):
    """Deterministic xavier_uniform-style init matching nn.Linear shapes.
    (Use dtype=jnp.bfloat16 on v5e/v6e/v7x for full MXU throughput and half
    the weight DMA bytes.)"""
    hidden = 4 * embed_dim
    k1, k2, k3, k4 = jax.random.split(key, 4)

    def xavier(k, fan_in, fan_out):
        bound = math.sqrt(6.0 / (fan_in + fan_out))
        # stored transposed relative to PyTorch ([in, out]) for row-major matmul
        return jax.random.uniform(k, (fan_in, fan_out), dtype, -bound, bound)

    def bias(k, fan_in, n):
        bound = 1.0 / math.sqrt(fan_in)
        return jax.random.uniform(k, (1, n), dtype, -bound, bound)

    w1 = xavier(k1, embed_dim, hidden)
    b1 = bias(k2, embed_dim, hidden)
    w2 = xavier(k3, hidden, embed_dim)
    b2 = bias(k4, hidden, embed_dim)
    return w1, b1, w2, b2


if __name__ == "__main__":
    key = jax.random.PRNGKey(0)
    bsz, seq, embed_dim = 2, 8, 32

    kx, kp = jax.random.split(key)
    x = jax.random.normal(kx, (bsz, seq, embed_dim), jnp.float32)
    w1, b1, w2, b2 = init_params(kp, embed_dim)

    out = feed_forward(x, w1, b1, w2, b2)
    out = jax.block_until_ready(out)

    # reference check in plain JAX
    ref = jnp.maximum(x @ w1 + b1[0], 0.0) @ w2 + b2[0]
    assert out.shape == x.shape
    assert jnp.allclose(out, ref, atol=1e-4, rtol=1e-4)

    print("KERNEL_OK")
</pallas_src>

<mosaic_0001>
module attributes {stable_mosaic.version = 11 : i64} {
  func.func @kernel(%arg0: i32, %arg1: memref<16x128xf32, #tpu.memory_space<vmem>>, %arg2: memref<128x128xf32, #tpu.memory_space<vmem>>, %arg3: memref<1x128xf32, #tpu.memory_space<vmem>>, %arg4: memref<128x128xf32, #tpu.memory_space<vmem>>, %arg5: memref<1x128xf32, #tpu.memory_space<vmem>>, %arg6: memref<16x128xf32, #tpu.memory_space<vmem>>) attributes {dimension_semantics = [#tpu.dimension_semantics<parallel>], iteration_bounds = array<i64: 1>, scalar_prefetch = 0 : i64, scratch_operands = 0 : i64, tpu.core_type = #tpu.core_type<tc>, window_params = [{transform_indices = @transform_0, window_bounds = array<i64: 16, 128>}, {pipeline_mode = #tpu.pipeline_mode<synchronous>, transform_indices = @transform_1, window_bounds = array<i64: 128, 128>}, {pipeline_mode = #tpu.pipeline_mode<synchronous>, transform_indices = @transform_2, window_bounds = array<i64: 1, 128>}, {pipeline_mode = #tpu.pipeline_mode<synchronous>, transform_indices = @transform_3, window_bounds = array<i64: 128, 128>}, {pipeline_mode = #tpu.pipeline_mode<synchronous>, transform_indices = @transform_4, window_bounds = array<i64: 1, 128>}, {transform_indices = @transform_5, window_bounds = array<i64: 16, 128>}]} {
    %c0 = arith.constant 0 : index
    %c0_0 = arith.constant 0 : index
    %0 = vector.load %arg1[%c0, %c0_0] : memref<16x128xf32, #tpu.memory_space<vmem>>, vector<16x128xf32>
    %c0_1 = arith.constant 0 : index
    %c0_2 = arith.constant 0 : index
    %1 = vector.load %arg5[%c0_1, %c0_2] : memref<1x128xf32, #tpu.memory_space<vmem>>, vector<1x128xf32>
    %c0_3 = arith.constant 0 : index
    %c0_4 = arith.constant 0 : index
    %2 = vector.load %arg2[%c0_3, %c0_4] : memref<128x128xf32, #tpu.memory_space<vmem>>, vector<128x128xf32>
    %cst = arith.constant dense<0.000000e+00> : vector<16x128xf32>
    %3 = tpu.matmul %0, %2, %cst {dimension_numbers = #tpu.dot_dimension_numbers<[1], [0], [0], [1], [0, 0, 1, 1], [], []>} : vector<16x128xf32>, vector<128x128xf32>, vector<16x128xf32> -> vector<16x128xf32>
    %c0_5 = arith.constant 0 : index
    %c0_6 = arith.constant 0 : index
    %4 = vector.load %arg3[%c0_5, %c0_6] : memref<1x128xf32, #tpu.memory_space<vmem>>, vector<1x128xf32>
    %5 = vector.broadcast %4 : vector<1x128xf32> to vector<16x128xf32>
    %6 = arith.addf %3, %5 : vector<16x128xf32>
    %cst_7 = arith.constant 0.000000e+00 : f32
    %7 = vector.broadcast %cst_7 : f32 to vector<16x128xf32>
    %8 = arith.maximumf %6, %7 : vector<16x128xf32>
    %c0_8 = arith.constant 0 : index
    %c0_9 = arith.constant 0 : index
    %9 = vector.load %arg4[%c0_8, %c0_9] : memref<128x128xf32, #tpu.memory_space<vmem>>, vector<128x128xf32>
    %cst_10 = arith.constant dense<0.000000e+00> : vector<16x128xf32>
    %10 = tpu.matmul %8, %9, %cst_10 {dimension_numbers = #tpu.dot_dimension_numbers<[1], [0], [0], [1], [0, 0, 1, 1], [], []>} : vector<16x128xf32>, vector<128x128xf32>, vector<16x128xf32> -> vector<16x128xf32>
    %11 = vector.broadcast %1 : vector<1x128xf32> to vector<16x128xf32>
    %12 = arith.addf %10, %11 : vector<16x128xf32>
    %c0_11 = arith.constant 0 : index
    %c0_12 = arith.constant 0 : index
    %13 = vector.load %arg6[%c0_11, %c0_12] : memref<16x128xf32, #tpu.memory_space<vmem>>, vector<16x128xf32>
    tpu.vector_store %arg6[%c0_11, %c0_12], %12 {strides = array<i32>} : memref<16x128xf32, #tpu.memory_space<vmem>>, vector<16x128xf32>,
    return
  }
  func.func @transform_0(%arg0: i32) -> (i32, i32) {
    %c0_i32 = arith.constant 0 : i32
    %c0_i32_0 = arith.constant 0 : i32
    return %arg0, %c0_i32 : i32, i32
  }
  func.func @transform_1(%arg0: i32) -> (i32, i32) {
    %c0_i32 = arith.constant 0 : i32
    %c0_i32_0 = arith.constant 0 : i32
    %c0_i32_1 = arith.constant 0 : i32
    return %c0_i32, %c0_i32_0 : i32, i32
  }
  func.func @transform_2(%arg0: i32) -> (i32, i32) {
    %c0_i32 = arith.constant 0 : i32
    %c0_i32_0 = arith.constant 0 : i32
    %c0_i32_1 = arith.constant 0 : i32
    return %c0_i32, %c0_i32_0 : i32, i32
  }
  func.func @transform_3(%arg0: i32) -> (i32, i32) {
    %c0_i32 = arith.constant 0 : i32
    %c0_i32_0 = arith.constant 0 : i32
    %c0_i32_1 = arith.constant 0 : i32
    return %c0_i32, %c0_i32_0 : i32, i32
  }
  func.func @transform_4(%arg0: i32) -> (i32, i32) {
    %c0_i32 = arith.constant 0 : i32
    %c0_i32_0 = arith.constant 0 : i32
    %c0_i32_1 = arith.constant 0 : i32
    return %c0_i32, %c0_i32_0 : i32, i32
  }
  func.func @transform_5(%arg0: i32) -> (i32, i32) {
    %c0_i32 = arith.constant 0 : i32
    %c0_i32_0 = arith.constant 0 : i32
    return %arg0, %c0_i32 : i32, i32
  }
}

</mosaic_0001>

<llo_original>
// kernel: tpu_custom_call.1
$region0: #{tpu_custom_call.1}
  #allocation0 [shape = 'u32[]', space=smem, size = 0x4, offset = 0x4, fixed_abs, tag = 'smem constant byte address 0x4 - core index']
  #allocation1 [shape = 'u32[144,128]{1,0:T(1,128)}', space=vmem, size = 0x12000, scoped, tag = 'internal scratch']
  %s0 = inlined_call_operand.hbm [shape: f32[16,128], index: 0, kind: input, shape index: {}]
  %s1 = inlined_call_operand.hbm [shape: f32[128,128], index: 1, kind: input, shape index: {}]
  %s2 = inlined_call_operand.vmem [shape: f32[1,128], index: 2, kind: input, shape index: {}]
  %s3 = inlined_call_operand.hbm [shape: f32[128,128], index: 3, kind: input, shape index: {}]
  %s4 = inlined_call_operand.vmem [shape: f32[1,128], index: 4, kind: input, shape index: {}]
  %s5 = inlined_call_operand.hbm [shape: f32[16,128], index: 5, kind: output, shape index: {}]
  %s6 = sld [smem:[#allocation0]]
  $region42: #{tpu_custom_call.1} parent=0
    _
  %s8 = ssub.s32 1, %s6
  %s9 = scalar_select 0, %s8, %s6
  $region1: #{tpu_custom_call.1} parent=0
    #allocation2 [shape = 'u8[8192]{0}', space=vmem, size = 0x2000, scoped, tag = 'input window, operand 0, single buffered']
    #allocation3 [shape = 's32[1]{0}', space=sflag, size = 0x4, scoped, tag = 'scoped memory for tpu_custom_call.1']
    #allocation4 [shape = 's32[1]{0}', space=sflag, size = 0x4, scoped, tag = 'scoped memory for tpu_custom_call.1']
    #allocation5 [shape = 'u8[65536]{0}', space=vmem, size = 0x10000, scoped, tag = 'input window, operand 1, single buffered']
    #allocation6 [shape = 's32[1]{0}', space=sflag, size = 0x4, scoped, tag = 'scoped memory for tpu_custom_call.1']
    #allocation7 [shape = 'u8[65536]{0}', space=vmem, size = 0x10000, scoped, tag = 'input window, operand 3, single buffered']
    #allocation8 [shape = 'u8[8192]{0}', space=vmem, size = 0x2000, scoped, tag = 'output window, operand 0, single buffered']
    %10 = vsyncpa [#allocation3], 0
    %11 = vsyncpa [#allocation6], 0
    %12 = vsyncpa [#allocation4], 0
    // Predicated region
    $region2: #{tpu_custom_call.1} parent=1 // pred_check
      _
    $region3: #{tpu_custom_call.1} parent=1 // pred_check_branch
      %14 = sbr.rel (0) target = $region5
    $region4: #{tpu_custom_call.1} parent=1 // pred_region
      %s16 = ssub.s32 256, 256
      %17 = vsyncadd [#allocation3], %s16
      %s18 = sshll.u32 [#allocation2], 4
      %s19 = int_to_ptr.vmem [resolvable:$true] %s18
      %24 = dma.hbm_to_vmem [thread:$0]  %s0, 256, %s19, [#allocation3], 128, 128, 8
    $region5: #{tpu_custom_call.1} parent=1 // pred_fallthru
      _
    // Predicated region
    $region6: #{tpu_custom_call.1} parent=1 // pred_check
      _
    $region7: #{tpu_custom_call.1} parent=1 // pred_check_branch
      %26 = sbr.rel (0) target = $region9
    $region8: #{tpu_custom_call.1} parent=1 // pred_region
      %s28 = ssub.s32 2048, 2048
      %29 = vsyncadd [#allocation6], %s28
      %s30 = sshll.u32 [#allocation5], 4
      %s31 = int_to_ptr.vmem [resolvable:$true] %s30
      %36 = dma.hbm_to_vmem [thread:$0]  %s1, 2048, %s31, [#allocation6], 128, 128, 8
    $region9: #{tpu_custom_call.1} parent=1 // pred_fallthru
      _
    // Predicated region
    $region10: #{tpu_custom_call.1} parent=1 // pred_check
      _
    $region11: #{tpu_custom_call.1} parent=1 // pred_check_branch
      %38 = sbr.rel (0) target = $region13
    $region12: #{tpu_custom_call.1} parent=1 // pred_region
      _
    $region13: #{tpu_custom_call.1} parent=1 // pred_fallthru
      _
    // Predicated region
    $region14: #{tpu_custom_call.1} parent=1 // pred_check
      _
    $region15: #{tpu_custom_call.1} parent=1 // pred_check_branch
      %40 = sbr.rel (0) target = $region17
    $region16: #{tpu_custom_call.1} parent=1 // pred_region
      %s42 = ssub.s32 2048, 2048
      %43 = vsyncadd [#allocation6], %s42
      %s44 = sshll.u32 [#allocation7], 4
      %s45 = int_to_ptr.vmem [resolvable:$true] %s44
      %50 = dma.hbm_to_vmem [thread:$0]  %s3, 2048, %s45, [#allocation6], 128, 128, 8
    $region17: #{tpu_custom_call.1} parent=1 // pred_fallthru
      _
    // Predicated region
    $region18: #{tpu_custom_call.1} parent=1 // pred_check
      _
    $region19: #{tpu_custom_call.1} parent=1 // pred_check_branch
      %52 = sbr.rel (0) target = $region21
    $region20: #{tpu_custom_call.1} parent=1 // pred_region
      _
    $region21: #{tpu_custom_call.1} parent=1 // pred_fallthru
      _
    // Predicated region
    $region22: #{tpu_custom_call.1} parent=1 // pred_check
      _
    $region23: #{tpu_custom_call.1} parent=1 // pred_check_branch
      %54 = sbr.rel (0) target = $region25
    $region24: #{tpu_custom_call.1} parent=1 // pred_region
      %55 = dma.done [#allocation3], 256
    $region25: #{tpu_custom_call.1} parent=1 // pred_fallthru
      _
    // Predicated region
    $region26: #{tpu_custom_call.1} parent=1 // pred_check
      _
    $region27: #{tpu_custom_call.1} parent=1 // pred_check_branch
      %57 = sbr.rel (0) target = $region29
    $region28: #{tpu_custom_call.1} parent=1 // pred_region
      %58 = dma.done [#allocation6], 2048
    $region29: #{tpu_custom_call.1} parent=1 // pred_fallthru
      _
    // Predicated region
    $region30: #{tpu_custom_call.1} parent=1 // pred_check
      _
    $region31: #{tpu_custom_call.1} parent=1 // pred_check_branch
      %60 = sbr.rel (0) target = $region33
    $region32: #{tpu_custom_call.1} parent=1 // pred_region
      %61 = dma.done [#allocation6], 2048
    $region33: #{tpu_custom_call.1} parent=1 // pred_fallthru
      _
    %v62 = vld [vmem:[#allocation2] sm:$0xff]
    %v63 = vld [vmem:[#allocation2 + $0x8] sm:$0xff]
    %v64 = vld [vmem:[%s4] sm:$0x1]
    %v65 = vld [vmem:[#allocation5] sm:$0xff]
    %v66 = vld [vmem:[#allocation5 + $0x8] sm:$0xff]
    %v67 = vld [vmem:[#allocation5 + $0x10] sm:$0xff]
    %v68 = vld [vmem:[#allocation5 + $0x18] sm:$0xff]
    %v69 = vld [vmem:[#allocation5 + $0x20] sm:$0xff]
    %v70 = vld [vmem:[#allocation5 + $0x28] sm:$0xff]
    %v71 = vld [vmem:[#allocation5 + $0x30] sm:$0xff]
    %v72 = vld [vmem:[#allocation5 + $0x38] sm:$0xff]
    %v73 = vld [vmem:[#allocation5 + $0x40] sm:$0xff]
    %v74 = vld [vmem:[#allocation5 + $0x48] sm:$0xff]
    %v75 = vld [vmem:[#allocation5 + $0x50] sm:$0xff]
    %v76 = vld [vmem:[#allocation5 + $0x58] sm:$0xff]
    %v77 = vld [vmem:[#allocation5 + $0x60] sm:$0xff]
    %v78 = vld [vmem:[#allocation5 + $0x68] sm:$0xff]
    %v79 = vld [vmem:[#allocation5 + $0x70] sm:$0xff]
    %v80 = vld [vmem:[#allocation5 + $0x78] sm:$0xff]
    %v81 = vld [vmem:[%s2] sm:$0x1]
    %v83 = vlaneseq
    %v84 = vshrl.u32 %v83, 7
    %v85 = vsub.s32 0, %v84
    %v86 = vrot.slane %v81, %v85
    %88 = vmatprep.subr.mxu0 0.0
    %89 = vmatpush1.msra.mxu0 %v80
    %90 = vmatprep.subr.mxu0 0.0
    %91 = vmatpush1.msra.mxu0 %v79
    %92 = vmatprep.subr.mxu0 0.0
    %93 = vmatpush1.msra.mxu0 %v78
    %94 = vmatprep.subr.mxu0 0.0
    %95 = vmatpush1.msra.mxu0 %v77
    %96 = vmatprep.subr.mxu0 0.0
    %97 = vmatpush1.msra.mxu0 %v76
    %98 = vmatprep.subr.mxu0 0.0
    %99 = vmatpush1.msra.mxu0 %v75
    %100 = vmatprep.subr.mxu0 0.0
    %101 = vmatpush1.msra.mxu0 %v74
    %102 = vmatprep.subr.mxu0 0.0
    %103 = vmatpush1.msra.mxu0 %v73
    %104 = vmatprep.subr.mxu0 0.0
    %105 = vmatpush1.msra.mxu0 %v72
    %106 = vmatprep.subr.mxu0 0.0
    %107 = vmatpush1.msra.mxu0 %v71
    %108 = vmatprep.subr.mxu0 0.0
    %109 = vmatpush1.msra.mxu0 %v70
    %110 = vmatprep.subr.mxu0 0.0
    %111 = vmatpush1.msra.mxu0 %v69
    %112 = vmatprep.subr.mxu0 0.0
    %113 = vmatpush1.msra.mxu0 %v68
    %114 = vmatprep.subr.mxu0 0.0
    %115 = vmatpush1.msra.mxu0 %v67
    %116 = vmatprep.subr.mxu0 0.0
    %117 = vmatpush1.msra.mxu0 %v66
    %118 = vmatprep.subr.mxu0 0.0
    %119 = vmatpush1.msra.mxu0 %v65
    %120 = vmatprep.subr.mxu0 0.0
    %121 = vmatpush2.msra.mxu0 0.0
    %122 = vmatprep.subr.mxu0 0.0
    %123 = vmatpush2.msra.mxu0 0.0
    %124 = vmatprep.subr.mxu0 0.0
    %125 = vmatpush2.msra.mxu0 0.0
    %126 = vmatprep.subr.mxu0 0.0
    %127 = vmatpush2.msra.mxu0 0.0
    %128 = vmatprep.subr.mxu0 0.0
    %129 = vmatpush2.msra.mxu0 0.0
    %130 = vmatprep.subr.mxu0 0.0
    %131 = vmatpush2.msra.mxu0 0.0
    %132 = vmatprep.subr.mxu0 0.0
    %133 = vmatpush2.msra.mxu0 0.0
    %134 = vmatprep.subr.mxu0 0.0
    %135 = vmatpush2.msra.mxu0 0.0
    %136 = vmatprep.subr.mxu0 0.0
    %137 = vmatpush2.msra.mxu0 0.0
    %138 = vmatprep.subr.mxu0 0.0
    %139 = vmatpush2.msra.mxu0 0.0
    %140 = vmatprep.subr.mxu0 0.0
    %141 = vmatpush2.msra.mxu0 0.0
    %142 = vmatprep.subr.mxu0 0.0
    %143 = vmatpush2.msra.mxu0 0.0
    %144 = vmatprep.subr.mxu0 0.0
    %145 = vmatpush2.msra.mxu0 0.0
    %146 = vmatprep.subr.mxu0 0.0
    %147 = vmatpush2.msra.mxu0 0.0
    %148 = vmatprep.subr.mxu0 0.0
    %149 = vmatpush2.msra.mxu0 0.0
    %150 = vmatprep.subr.mxu0 0.0
    %151 = vmatpush2.msra.mxu0 0.0
    %152 = vmatprep.mubr.f32.mxu0 0.0
    %153 = vmatmul.mubr.f32.gmra.mxu0 %v62
    %v154 = vpop.f32.mrf.mxu0
    %v155 = vadd.f32 %v86, %v154
    %v156 = vpop.f32.mrf.mxu0
    %157 = vmatprep.mubr.f32.mxu0 0.0
    %158 = vmatmul.mubr.f32.gmra.mxu0 %v63
    %v159 = vpop.f32.mrf.mxu0
    %v160 = vadd.f32 %v86, %v159
    %v161 = vpop.f32.mrf.mxu0
    %162 = vdwg.mxu0
    %v163 = vmax.f32 %v155, 0.0
    %v164 = vmax.f32 %v160, 0.0
    %v165 = vld [vmem:[#allocation7] sm:$0xff]
    %v166 = vld [vmem:[#allocation7 + $0x8] sm:$0xff]
    %v167 = vld [vmem:[#allocation7 + $0x10] sm:$0xff]
    %v168 = vld [vmem:[#allocation7 + $0x18] sm:$0xff]
    %v169 = vld [vmem:[#allocation7 + $0x20] sm:$0xff]
    %v170 = vld [vmem:[#allocation7 + $0x28] sm:$0xff]
    %v171 = vld [vmem:[#allocation7 + $0x30] sm:$0xff]
    %v172 = vld [vmem:[#allocation7 + $0x38] sm:$0xff]
    %v173 = vld [vmem:[#allocation7 + $0x40] sm:$0xff]
    %v174 = vld [vmem:[#allocation7 + $0x48] sm:$0xff]
    %v175 = vld [vmem:[#allocation7 + $0x50] sm:$0xff]
    %v176 = vld [vmem:[#allocation7 + $0x58] sm:$0xff]
    %v177 = vld [vmem:[#allocation7 + $0x60] sm:$0xff]
    %v178 = vld [vmem:[#allocation7 + $0x68] sm:$0xff]
    %v179 = vld [vmem:[#allocation7 + $0x70] sm:$0xff]
    %v180 = vld [vmem:[#allocation7 + $0x78] sm:$0xff]
    %v182 = vlaneseq
    %v183 = vshrl.u32 %v182, 7
    %v184 = vsub.s32 0, %v183
    %v185 = vrot.slane %v64, %v184
    %187 = vmatprep.subr.mxu0 0.0
    %188 = vmatpush1.msra.mxu0 %v180
    %189 = vmatprep.subr.mxu0 0.0
    %190 = vmatpush1.msra.mxu0 %v179
    %191 = vmatprep.subr.mxu0 0.0
    %192 = vmatpush1.msra.mxu0 %v178
    %193 = vmatprep.subr.mxu0 0.0
    %194 = vmatpush1.msra.mxu0 %v177
    %195 = vmatprep.subr.mxu0 0.0
    %196 = vmatpush1.msra.mxu0 %v176
    %197 = vmatprep.subr.mxu0 0.0
    %198 = vmatpush1.msra.mxu0 %v175
    %199 = vmatprep.subr.mxu0 0.0
    %200 = vmatpush1.msra.mxu0 %v174
    %201 = vmatprep.subr.mxu0 0.0
    %202 = vmatpush1.msra.mxu0 %v173
    %203 = vmatprep.subr.mxu0 0.0
    %204 = vmatpush1.msra.mxu0 %v172
    %205 = vmatprep.subr.mxu0 0.0
    %206 = vmatpush1.msra.mxu0 %v171
    %207 = vmatprep.subr.mxu0 0.0
    %208 = vmatpush1.msra.mxu0 %v170
    %209 = vmatprep.subr.mxu0 0.0
    %210 = vmatpush1.msra.mxu0 %v169
    %211 = vmatprep.subr.mxu0 0.0
    %212 = vmatpush1.msra.mxu0 %v168
    %213 = vmatprep.subr.mxu0 0.0
    %214 = vmatpush1.msra.mxu0 %v167
    %215 = vmatprep.subr.mxu0 0.0
    %216 = vmatpush1.msra.mxu0 %v166
    %217 = vmatprep.subr.mxu0 0.0
    %218 = vmatpush1.msra.mxu0 %v165
    %219 = vmatprep.subr.mxu0 0.0
    %220 = vmatpush2.msra.mxu0 0.0
    %221 = vmatprep.subr.mxu0 0.0
    %222 = vmatpush2.msra.mxu0 0.0
    %223 = vmatprep.subr.mxu0 0.0
    %224 = vmatpush2.msra.mxu0 0.0
    %225 = vmatprep.subr.mxu0 0.0
    %226 = vmatpush2.msra.mxu0 0.0
    %227 = vmatprep.subr.mxu0 0.0
    %228 = vmatpush2.msra.mxu0 0.0
    %229 = vmatprep.subr.mxu0 0.0
    %230 = vmatpush2.msra.mxu0 0.0
    %231 = vmatprep.subr.mxu0 0.0
    %232 = vmatpush2.msra.mxu0 0.0
    %233 = vmatprep.subr.mxu0 0.0
    %234 = vmatpush2.msra.mxu0 0.0
    %235 = vmatprep.subr.mxu0 0.0
    %236 = vmatpush2.msra.mxu0 0.0
    %237 = vmatprep.subr.mxu0 0.0
    %238 = vmatpush2.msra.mxu0 0.0
    %239 = vmatprep.subr.mxu0 0.0
    %240 = vmatpush2.msra.mxu0 0.0
    %241 = vmatprep.subr.mxu0 0.0
    %242 = vmatpush2.msra.mxu0 0.0
    %243 = vmatprep.subr.mxu0 0.0
    %244 = vmatpush2.msra.mxu0 0.0
    %245 = vmatprep.subr.mxu0 0.0
    %246 = vmatpush2.msra.mxu0 0.0
    %247 = vmatprep.subr.mxu0 0.0
    %248 = vmatpush2.msra.mxu0 0.0
    %249 = vmatprep.subr.mxu0 0.0
    %250 = vmatpush2.msra.mxu0 0.0
    %251 = vmatprep.mubr.f32.mxu0 0.0
    %252 = vmatmul.mubr.f32.gmra.mxu0 %v163
    %v253 = vpop.f32.mrf.mxu0
    %v254 = vadd.f32 %v185, %v253
    %v255 = vpop.f32.mrf.mxu0
    %256 = vmatprep.mubr.f32.mxu0 0.0
    %257 = vmatmul.mubr.f32.gmra.mxu0 %v164
    %v258 = vpop.f32.mrf.mxu0
    %v259 = vadd.f32 %v185, %v258
    %v260 = vpop.f32.mrf.mxu0
    %261 = vdwg.mxu0
    %262 = vst [vmem:[#allocation8] sm:$0xff] %v254
    %263 = vst [vmem:[#allocation8 + $0x8] sm:$0xff] %v259
    // Predicated region
    $region34: #{tpu_custom_call.1} parent=1 // pred_check
      _
    $region35: #{tpu_custom_call.1} parent=1 // pred_check_branch
      %265 = sbr.rel (0) target = $region37
    $region36: #{tpu_custom_call.1} parent=1 // pred_region
      %s267 = ssub.s32 256, 256
      %268 = vsyncadd [#allocation4], %s267
      %s269 = sshll.u32 [#allocation8], 4
      %s270 = int_to_ptr.vmem [resolvable:$true] %s269
      %275 = dma.vmem_to_hbm [thread:$0]  %s270, 256, %s5, [#allocation4], 128, 128, 8
    $region37: #{tpu_custom_call.1} parent=1 // pred_fallthru
      _
    // Predicated region
    $region38: #{tpu_custom_call.1} parent=1 // pred_check
      _
    $region39: #{tpu_custom_call.1} parent=1 // pred_check_branch
      %277 = sbr.rel (0) target = $region41
    $region40: #{tpu_custom_call.1} parent=1 // pred_region
      %278 = dma.done [#allocation4], 256
    $region41: #{tpu_custom_call.1} parent=1 // pred_fallthru
      _
    %279 = vsyncpa [#allocation3], 1
    %280 = vsyncpa [#allocation6], 1
    %281 = vsyncpa [#allocation4], 1

</llo_original>
